<compile_context>
chip_gen: v7x
topology: tpu7x:2x2x1
jax: 0.10.0
libtpu: 0.0.40
codegen_flags: <defaults>
</compile_context>

<pallas_src>
import jax
import jax.numpy as jnp
from jax.experimental import pallas as pl
from jax.experimental.pallas import tpu as pltpu

HALF_ALPHA = 0.01  # matches LeakyRelu(half_alpha=0.01)

_LANE = 128
_TARGET_BLOCK_BYTES = 4 * 1024 * 1024        # ~4 MiB per block
_VMEM_LIMIT_BYTES = 40 * 1024 * 1024         # explicit budget; worst case uses ~16 MiB
_RAGGED_SINGLE_BLOCK_BYTES = 4 * 1024 * 1024  # ragged inputs up to this run as one block


def _leaky_relu_kernel(x_ref, o_ref):
    # Exact module formula, computed in f32 (no-op for f32 inputs, avoids
    # catastrophic cancellation for bf16/fp16 on the negative branch).
    x = x_ref[...].astype(jnp.float32)
    y = (0.5 + HALF_ALPHA) * x + (0.5 - HALF_ALPHA) * jnp.abs(x)
    o_ref[...] = y.astype(o_ref.dtype)


def _sublane(dtype):
    # native sublane packing: 8 rows for 32-bit, 16 for 16-bit, 32 for 8-bit
    return {4: 8, 2: 16, 1: 32}.get(jnp.dtype(dtype).itemsize, 8)


def _pick_width(total, min_rows):
    """Largest lane-dense width (multiple of 128) that divides `total`."""
    candidates = (8192, 4096, 2048, 1024, 512, 384, 256, 128)
    for w in candidates:                      # prefer layouts with >= min_rows rows
        if total % w == 0 and total // w >= min_rows:
            return w
    for w in candidates:
        if total % w == 0:
            return w
    return None


def _run_2d(x2d):
    rows, width = x2d.shape
    dtype = x2d.dtype
    sub = _sublane(dtype)
    itemsize = jnp.dtype(dtype).itemsize

    # Tile rows so one block is ~_TARGET_BLOCK_BYTES, aligned to the sublane tile.
    tile_rows = max(1, _TARGET_BLOCK_BYTES // (width * itemsize))
    if tile_rows >= rows:
        tile_rows = rows                       # full-extent block is always legal
    else:
        tile_rows = max(sub, (tile_rows // sub) * sub)

    grid = (pl.cdiv(rows, tile_rows),)         # partial last block handled by Pallas
    n_elems = rows * width

    return pl.pallas_call(
        _leaky_relu_kernel,
        out_shape=jax.ShapeDtypeStruct((rows, width), dtype),
        grid_spec=pltpu.PrefetchScalarGridSpec(
            num_scalar_prefetch=0,
            grid=grid,
            in_specs=[pl.BlockSpec((tile_rows, width), lambda i: (i, 0))],
            out_specs=pl.BlockSpec((tile_rows, width), lambda i: (i, 0)),
        ),
        input_output_aliases={0: 0},           # reuse input buffer when donated
        cost_estimate=pl.CostEstimate(
            flops=4 * n_elems,
            transcendentals=0,
            bytes_accessed=2 * n_elems * itemsize),
        compiler_params=pltpu.CompilerParams(
            dimension_semantics=("parallel",),
            vmem_limit_bytes=_VMEM_LIMIT_BYTES),
    )(x2d)


def leaky_relu(x):
    """Pallas TPU implementation of (0.5+ha)*x + (0.5-ha)*|x| (elementwise)."""
    orig_shape = x.shape
    total = x.size
    if total == 0:
        return x
    dtype = x.dtype
    itemsize = jnp.dtype(dtype).itemsize

    width = _pick_width(total, min_rows=_sublane(dtype))
    if width is not None:
        # Fast path: free reshape into a lane-dense slab, no pad, no slice.
        out2d = _run_2d(x.reshape(total // width, width))
        return out2d.reshape(orig_shape)

    # Ragged path (element count not a multiple of 128).
    if total * itemsize <= _RAGGED_SINGLE_BLOCK_BYTES:
        # Single full-extent (1, total) block: legal since the block equals the
        # full array dims; Mosaic masks the partial lanes. No pad, no slice.
        out2d = _run_2d(x.reshape(1, total))
        return out2d.reshape(orig_shape)

    # TODO(synk): large ragged arrays still pay pad + slice (~3x HBM traffic);
    # handle the tail with a masked partial last block if such sizes ever matter.
    rows = -(-total // _LANE)
    flat = jnp.pad(jnp.ravel(x), (0, rows * _LANE - total))
    out2d = _run_2d(flat.reshape(rows, _LANE))
    return out2d.reshape(-1)[:total].reshape(orig_shape)


if __name__ == "__main__":
    key = jax.random.PRNGKey(0)
    # NCHW, small shapes consistent with the module: batch=2, channels=4, 16x16
    x = jax.random.normal(key, (2, 4, 16, 16), dtype=jnp.float32)

    # reference (plain JAX, same formula as the torch module), computed first
    ref = (0.5 + HALF_ALPHA) * x + (0.5 - HALF_ALPHA) * jnp.abs(x)

    y = jax.block_until_ready(leaky_relu(x))

    assert y.shape == x.shape and y.dtype == x.dtype
    assert jnp.allclose(y, ref, atol=1e-6, rtol=1e-6)

    print("KERNEL_OK")
</pallas_src>

<mosaic_0001>
module attributes {stable_mosaic.version = 11 : i64} {
  func.func @_leaky_relu_kernel(%arg0: i32, %arg1: memref<8x256xf32, #tpu.memory_space<vmem>>, %arg2: memref<8x256xf32, #tpu.memory_space<vmem>>) attributes {dimension_semantics = [#tpu.dimension_semantics<parallel>], iteration_bounds = array<i64: 1>, scalar_prefetch = 0 : i64, scratch_operands = 0 : i64, tpu.core_type = #tpu.core_type<tc>, window_params = [{transform_indices = @transform_0, window_bounds = array<i64: 8, 256>}, {transform_indices = @transform_1, window_bounds = array<i64: 8, 256>}]} {
    %c0 = arith.constant 0 : index
    %c0_0 = arith.constant 0 : index
    %0 = vector.load %arg1[%c0, %c0_0] : memref<8x256xf32, #tpu.memory_space<vmem>>, vector<8x256xf32>
    %cst = arith.constant 5.100000e-01 : f32
    %1 = vector.broadcast %cst : f32 to vector<8x256xf32>
    %2 = arith.mulf %1, %0 : vector<8x256xf32>
    %3 = math.absf %0 : vector<8x256xf32>
    %cst_1 = arith.constant 4.900000e-01 : f32
    %4 = vector.broadcast %cst_1 : f32 to vector<8x256xf32>
    %5 = arith.mulf %4, %3 : vector<8x256xf32>
    %6 = arith.addf %2, %5 : vector<8x256xf32>
    %c0_2 = arith.constant 0 : index
    %c0_3 = arith.constant 0 : index
    %7 = vector.load %arg2[%c0_2, %c0_3] : memref<8x256xf32, #tpu.memory_space<vmem>>, vector<8x256xf32>
    tpu.vector_store %arg2[%c0_2, %c0_3], %6 {strides = array<i32>} : memref<8x256xf32, #tpu.memory_space<vmem>>, vector<8x256xf32>,
    return
  }
  func.func @transform_0(%arg0: i32) -> (i32, i32) {
    %c0_i32 = arith.constant 0 : i32
    %c0_i32_0 = arith.constant 0 : i32
    return %arg0, %c0_i32 : i32, i32
  }
  func.func @transform_1(%arg0: i32) -> (i32, i32) {
    %c0_i32 = arith.constant 0 : i32
    %c0_i32_0 = arith.constant 0 : i32
    return %arg0, %c0_i32 : i32, i32
  }
}

</mosaic_0001>

<llo_original>
// kernel: tpu_custom_call.1
$region0: #{tpu_custom_call.1}
  #allocation0 [shape = 'u32[]', space=smem, size = 0x4, offset = 0x4, fixed_abs, tag = 'smem constant byte address 0x4 - core index']
  #allocation1 [shape = 'u32[144,128]{1,0:T(1,128)}', space=vmem, size = 0x12000, scoped, tag = 'internal scratch']
  %s0 = inlined_call_operand.hbm [shape: f32[8,256], index: 0, kind: input, shape index: {}, may-alias: {0,1}]
  %s1 = inlined_call_operand.hbm [shape: f32[8,256], index: 1, kind: output, shape index: {}, may-alias: {0,1}]
  %s2 = sld [smem:[#allocation0]]
  $region18: #{tpu_custom_call.1} parent=0
    _
  %s4 = ssub.s32 1, %s2
  %s5 = scalar_select 0, %s4, %s2
  $region1: #{tpu_custom_call.1} parent=0
    #allocation2 [shape = 'u8[8192]{0}', space=vmem, size = 0x2000, scoped, tag = 'input window, operand 0, single buffered']
    #allocation3 [shape = 's32[1]{0}', space=sflag, size = 0x4, scoped, tag = 'scoped memory for tpu_custom_call.1']
    #allocation4 [shape = 's32[1]{0}', space=sflag, size = 0x4, scoped, tag = 'scoped memory for tpu_custom_call.1']
    #allocation5 [shape = 'u8[8192]{0}', space=vmem, size = 0x2000, scoped, tag = 'output window, operand 0, single buffered']
    %6 = vsyncpa [#allocation3], 0
    %7 = vsyncpa [#allocation4], 0
    // Predicated region
    $region2: #{tpu_custom_call.1} parent=1 // pred_check
      _
    $region3: #{tpu_custom_call.1} parent=1 // pred_check_branch
      %9 = sbr.rel (0) target = $region5
    $region4: #{tpu_custom_call.1} parent=1 // pred_region
      %s11 = ssub.s32 256, 256
      %12 = vsyncadd [#allocation3], %s11
      %s14 = sshll.u32 [#allocation2], 4
      %s15 = int_to_ptr.vmem [resolvable:$true] %s14
      %17 = dma.hbm_to_vmem [thread:$0]  %s0, 256, %s15, [#allocation3]
    $region5: #{tpu_custom_call.1} parent=1 // pred_fallthru
      _
    // Predicated region
    $region6: #{tpu_custom_call.1} parent=1 // pred_check
      _
    $region7: #{tpu_custom_call.1} parent=1 // pred_check_branch
      %19 = sbr.rel (0) target = $region9
    $region8: #{tpu_custom_call.1} parent=1 // pred_region
      %20 = dma.done [#allocation3], 256
    $region9: #{tpu_custom_call.1} parent=1 // pred_fallthru
      _
    %v21 = vld [vmem:[#allocation2] sm:$0xff]
    %v22 = vld [vmem:[#allocation2 + $0x8] sm:$0xff]
    %v23 = vmul.f32 %v21, 0.51
    %v24 = vmul.f32 %v22, 0.51
    %v25 = vand.u32 2147483647, %v21
    %v26 = vand.u32 2147483647, %v22
    %v27 = vmul.f32 %v25, 0.49
    %v28 = vmul.f32 %v26, 0.49
    %v29 = vadd.f32 %v23, %v27
    %v30 = vadd.f32 %v24, %v28
    %31 = vst [vmem:[#allocation5] sm:$0xff] %v29
    %32 = vst [vmem:[#allocation5 + $0x8] sm:$0xff] %v30
    // Predicated region
    $region10: #{tpu_custom_call.1} parent=1 // pred_check
      _
    $region11: #{tpu_custom_call.1} parent=1 // pred_check_branch
      %34 = sbr.rel (0) target = $region13
    $region12: #{tpu_custom_call.1} parent=1 // pred_region
      %s36 = ssub.s32 256, 256
      %37 = vsyncadd [#allocation4], %s36
      %s39 = sshll.u32 [#allocation5], 4
      %s40 = int_to_ptr.vmem [resolvable:$true] %s39
      %42 = dma.vmem_to_hbm [thread:$0]  %s40, 256, %s1, [#allocation4]
    $region13: #{tpu_custom_call.1} parent=1 // pred_fallthru
      _
    // Predicated region
    $region14: #{tpu_custom_call.1} parent=1 // pred_check
      _
    $region15: #{tpu_custom_call.1} parent=1 // pred_check_branch
      %44 = sbr.rel (0) target = $region17
    $region16: #{tpu_custom_call.1} parent=1 // pred_region
      %45 = dma.done [#allocation4], 256
    $region17: #{tpu_custom_call.1} parent=1 // pred_fallthru
      _
    %46 = vsyncpa [#allocation3], 1
    %47 = vsyncpa [#allocation4], 1

</llo_original>
